<compile_context>
chip_gen: v7x
topology: tpu7x:2x2x1
jax: 0.10.0
libtpu: 0.0.40
codegen_flags: <defaults>
</compile_context>

<pallas_src>
import functools
import math

import jax
import jax.numpy as jnp
from jax.experimental import pallas as pl
from jax.experimental.pallas import tpu as pltpu


def attention_block_kernel(L,
                           x_ref,                       # (Ci, NL)      bf16
                           wc_ref,                      # (2*Co, 3*Ci)  bf16  conv1 + shortcut fused
                           g1_ref, b1_ref,              # (Co, 1)       f32
                           w2_ref,                      # (Co, 3*Co)    bf16
                           g2_ref, b2_ref,              # (Co, 1)
                           fw1_ref, fb1_ref,            # (Co, Co), (Co, 1)
                           fg_ref, fbeta_ref,           # (Co, 1)
                           fw2_ref, fb2_ref,            # (Co, Co), (Co, 1)
                           saw_ref,                     # (1, 14) spatial-attn taps, k-major
                           gs_ref, bs_ref,              # (Co, 1) shortcut BN
                           pool_ref,                    # (NL, N) per-sequence mean matrix
                           bcast_ref,                   # (N, NL) per-sequence broadcast matrix
                           o_ref):                      # (Co, NL) f32
    NL = x_ref.shape[1]
    Co = o_ref.shape[0]
    mm_dtype = wc_ref.dtype

    # --- hoisted per-token position masks, shared by conv1, conv2 and all SA taps ---
    pos = jax.lax.broadcasted_iota(jnp.int32, (1, NL), 1) % L
    masks = {s: (pos >= s) & (pos <= (L - 1) + s) for s in (1, -1, 2, -2, 3, -3)}

    def shifted(a, s):
        # zero-padded "same" shift within each length-L sequence; the position mask
        # also prevents any cross-batch leakage from the roll. Runs at a's dtype.
        if s == 0:
            return a
        return jnp.where(masks[s], jnp.roll(a, s, axis=1), jnp.zeros((), a.dtype))

    def conv_operand(a, taps):
        # stack shifted/masked copies along the contraction axis so the whole k-tap
        # conv becomes ONE MXU matmul; cast once up front so shifts run at bf16 width.
        a = a.astype(mm_dtype)
        return jnp.concatenate([shifted(a, s) for s in taps], axis=0)

    def bn(a, g, b, eps=1e-5):
        # training-mode BatchNorm, fused single-pass stats: var = E[x^2] - E[x]^2,
        # scale/shift folded into one multiply-add.
        inv_m = 1.0 / a.shape[1]
        mean = jnp.sum(a, axis=1, keepdims=True) * inv_m
        msq = jnp.sum(a * a, axis=1, keepdims=True) * inv_m
        scale = g * jax.lax.rsqrt(msq - mean * mean + eps)
        return a * scale + (b - mean * scale)

    def sigmoid(z):
        # exp and approximate reciprocal both ride the (otherwise idle) EUP slot.
        return pl.reciprocal(1.0 + jnp.exp(-z), approx=True)

    # --- conv1 (k=3) fused with the 1x1 shortcut conv: one matmul -> (2*Co, NL) ------
    xs = conv_operand(x_ref[...], (1, 0, -1))                          # (3*Ci, NL) bf16
    comb = jnp.dot(wc_ref[...], xs, preferred_element_type=jnp.float32)
    h = comb[:Co, :]                                                   # residual conv1
    sc = comb[Co:, :]                                                  # shortcut 1x1 conv

    # --- residual branch: BN -> ReLU -> conv2 -> BN ----------------------------------
    h = jnp.maximum(bn(h, g1_ref[...], b1_ref[...]), 0.0)
    hs = conv_operand(h, (1, 0, -1))                                   # (3*Co, NL) bf16
    h = bn(jnp.dot(w2_ref[...], hs, preferred_element_type=jnp.float32),
           g2_ref[...], b2_ref[...])                                   # (Co, NL) f32

    # --- Shrinkage (soft thresholding) ------------------------------------------------
    habs = jnp.abs(h)
    avg = jnp.dot(habs, pool_ref[...], preferred_element_type=jnp.float32)   # (Co, N) == GAP(|x|)
    z = jnp.dot(fw1_ref[...], avg, preferred_element_type=jnp.float32) + fb1_ref[...]
    z = jnp.maximum(bn(z, fg_ref[...], fbeta_ref[...]), 0.0)
    z = jnp.dot(fw2_ref[...], z, preferred_element_type=jnp.float32) + fb2_ref[...]
    thr = avg * sigmoid(z)                                             # (Co, N), thr >= 0
    thr_full = jnp.dot(thr, bcast_ref[...], preferred_element_type=jnp.float32)  # (Co, NL)
    # soft threshold: sign(h)*relu(|h|-t) == h - clip(h,-t,t) for t >= 0 (fewer VPU ops)
    shr = h - jnp.clip(h, -thr_full, thr_full)

    # --- SpatialAttention (k=7, p=3): all 7 taps packed into one matmul ---------------
    avg_c = jnp.sum(shr, axis=0, keepdims=True) * (1.0 / Co)           # (1, NL) mean over C
    max_c = jnp.max(shr, axis=0, keepdims=True)                        # (1, NL) max over C
    cat = jnp.concatenate([avg_c, max_c], axis=0)                      # (2, NL)
    cat7 = jnp.concatenate([shifted(cat, 3 - k) for k in range(7)], axis=0)  # (14, NL)
    att = sigmoid(jnp.dot(saw_ref[...], cat7, preferred_element_type=jnp.float32))  # (1, NL)
    res = shr * att

    # --- shortcut BN, add, final ReLU ---------------------------------------------------
    sc = bn(sc, gs_ref[...], bs_ref[...])
    o_ref[...] = jnp.maximum(res + sc, 0.0)


def init_params(key, c_in, c_out):
    ks = jax.random.split(key, 8)

    def nrm(k, shape, scale):
        return (scale * jax.random.normal(k, shape)).astype(jnp.float32)

    ones = jnp.ones((c_out,), jnp.float32)
    zeros = jnp.zeros((c_out,), jnp.float32)
    return {
        "conv1_w": nrm(ks[0], (c_out, c_in, 3), 1.0 / math.sqrt(c_in * 3)),
        "bn1_g": ones, "bn1_b": zeros,
        "conv2_w": nrm(ks[1], (c_out, c_out, 3), 1.0 / math.sqrt(c_out * 3)),
        "bn2_g": ones, "bn2_b": zeros,
        "fc1_w": nrm(ks[2], (c_out, c_out), 1.0 / math.sqrt(c_out)),
        "fc1_b": nrm(ks[3], (c_out,), 0.1),
        "fcbn_g": ones, "fcbn_b": zeros,
        "fc2_w": nrm(ks[4], (c_out, c_out), 1.0 / math.sqrt(c_out)),
        "fc2_b": nrm(ks[5], (c_out,), 0.1),
        "sa_w": nrm(ks[6], (1, 2, 7), 1.0 / math.sqrt(14)),
        "sc_w": nrm(ks[7], (c_out, c_in, 1), 1.0 / math.sqrt(c_in)),
        "scbn_g": ones, "scbn_b": zeros,
    }


def attention_block(x, params, stride=1):
    # x: (N, C_in, L) in PyTorch NCL layout.
    assert stride == 1  # TODO(synk): stride > 1 downsampling path not implemented.
    N, Ci, L = x.shape
    Co = params["conv1_w"].shape[0]
    NL = N * L
    mm_dtype = jnp.bfloat16   # streaming / matmul-operand dtype; stats stay f32

    # channels-major token tile: tokens on the 128-lane axis, channels on sublanes
    x_cm = jnp.transpose(x, (1, 0, 2)).reshape(Ci, NL).astype(mm_dtype)

    def col(v):
        return v.reshape(-1, 1).astype(jnp.float32)

    # conv1 taps stacked along K, 1x1 shortcut fused as extra output rows (center tap only)
    w1s = jnp.transpose(params["conv1_w"], (0, 2, 1)).reshape(Co, 3 * Ci)      # [co, k*Ci+ci]
    w_sc = params["sc_w"][:, :, 0]                                             # (Co, Ci)
    zeros_ci = jnp.zeros((Co, Ci), jnp.float32)
    wcomb = jnp.concatenate(
        [w1s, jnp.concatenate([zeros_ci, w_sc, zeros_ci], axis=1)], axis=0
    ).astype(mm_dtype)                                                          # (2*Co, 3*Ci)
    w2s = jnp.transpose(params["conv2_w"], (0, 2, 1)).reshape(Co, 3 * Co).astype(mm_dtype)
    sa_flat = jnp.transpose(params["sa_w"], (0, 2, 1)).reshape(1, 14).astype(jnp.float32)

    # per-sequence GAP / broadcast expressed as small matmuls (layout-safe for any L)
    onehot = jnp.repeat(jnp.eye(N, dtype=jnp.float32), L, axis=0)               # (NL, N)
    pool = onehot / float(L)                                                    # (NL, N)
    bcast = onehot.T                                                            # (N, NL)

    args = (
        x_cm, wcomb,
        col(params["bn1_g"]), col(params["bn1_b"]),
        w2s, col(params["bn2_g"]), col(params["bn2_b"]),
        params["fc1_w"].astype(jnp.float32), col(params["fc1_b"]),
        col(params["fcbn_g"]), col(params["fcbn_b"]),
        params["fc2_w"].astype(jnp.float32), col(params["fc2_b"]),
        sa_flat,
        col(params["scbn_g"]), col(params["scbn_b"]),
        pool, bcast,
    )

    kernel = functools.partial(attention_block_kernel, L)
    vmem = pl.BlockSpec(memory_space=pltpu.MemorySpace.VMEM)
    # TODO(synk): at production sizes add a token-block grid (two-pass BN stats or a
    # reduction grid axis with pl.when init/finalize) so the (C, N*L) working set is
    # tiled and the batch can be megacore-sharded; the batch-coupled training-mode
    # BatchNorms keep this version a single invocation.
    out_cm = pl.pallas_call(
        kernel,
        out_shape=jax.ShapeDtypeStruct((Co, NL), jnp.float32),
        in_specs=[vmem] * len(args),
        out_specs=vmem,
        compiler_params=pltpu.CompilerParams(vmem_limit_bytes=32 * 1024 * 1024),
    )(*args)
    return jnp.transpose(out_cm.reshape(Co, N, L), (1, 0, 2))


if __name__ == "__main__":
    key = jax.random.PRNGKey(0)
    kx, kp = jax.random.split(key)
    N, Ci, Co, L = 2, 4, 8, 16
    x = jax.random.normal(kx, (N, Ci, L), jnp.float32)
    params = init_params(kp, Ci, Co)

    out = attention_block(x, params)
    jax.block_until_ready(out)
    assert out.shape == (N, Co, L)
    assert bool(jnp.all(jnp.isfinite(out)))
    assert bool(jnp.all(out >= 0.0))  # final ReLU
    print("KERNEL_OK")
</pallas_src>

<mosaic_0001>
module attributes {stable_mosaic.version = 11 : i64} {
  func.func @attention_block_kernel(%arg0: memref<4x32xbf16, #tpu.memory_space<vmem>>, %arg1: memref<16x12xbf16, #tpu.memory_space<vmem>>, %arg2: memref<8x1xf32, #tpu.memory_space<vmem>>, %arg3: memref<8x1xf32, #tpu.memory_space<vmem>>, %arg4: memref<8x24xbf16, #tpu.memory_space<vmem>>, %arg5: memref<8x1xf32, #tpu.memory_space<vmem>>, %arg6: memref<8x1xf32, #tpu.memory_space<vmem>>, %arg7: memref<8x8xf32, #tpu.memory_space<vmem>>, %arg8: memref<8x1xf32, #tpu.memory_space<vmem>>, %arg9: memref<8x1xf32, #tpu.memory_space<vmem>>, %arg10: memref<8x1xf32, #tpu.memory_space<vmem>>, %arg11: memref<8x8xf32, #tpu.memory_space<vmem>>, %arg12: memref<8x1xf32, #tpu.memory_space<vmem>>, %arg13: memref<1x14xf32, #tpu.memory_space<vmem>>, %arg14: memref<8x1xf32, #tpu.memory_space<vmem>>, %arg15: memref<8x1xf32, #tpu.memory_space<vmem>>, %arg16: memref<32x2xf32, #tpu.memory_space<vmem>>, %arg17: memref<2x32xf32, #tpu.memory_space<vmem>>, %arg18: memref<8x32xf32, #tpu.memory_space<vmem>>) attributes {dimension_semantics = [], scalar_prefetch = 0 : i64, scratch_operands = 0 : i64, tpu.core_type = #tpu.core_type<tc>} {
    %0 = tpu.iota {dimensions = array<i32: 1>} : vector<1x32xi32>
    %c16_i32 = arith.constant 16 : i32
    %c0_i32 = arith.constant 0 : i32
    %1 = arith.cmpi eq, %c16_i32, %c0_i32 : i32
    %c1_i32 = arith.constant 1 : i32
    %2 = arith.select %1, %c1_i32, %c16_i32 : i32
    %3 = vector.broadcast %2 : i32 to vector<1x32xi32>
    %4 = arith.remsi %0, %3 : vector<1x32xi32>
    %c0_i32_0 = arith.constant 0 : i32
    %5 = vector.broadcast %c0_i32_0 : i32 to vector<1x32xi32>
    %6 = arith.cmpi ne, %4, %5 : vector<1x32xi32>
    %c0_i32_1 = arith.constant 0 : i32
    %7 = vector.broadcast %c0_i32_1 : i32 to vector<1x32xi32>
    %8 = arith.cmpi slt, %4, %7 : vector<1x32xi32>
    %c0_i32_2 = arith.constant 0 : i32
    %9 = arith.cmpi slt, %2, %c0_i32_2 : i32
    %10 = vector.broadcast %9 : i1 to vector<1x32xi1>
    %11 = vector.broadcast %10 : vector<1x32xi1> to vector<1x32xi1>
    %12 = arith.xori %8, %11 : vector<1x32xi1>
    %13 = arith.andi %12, %6 : vector<1x32xi1>
    %14 = vector.broadcast %2 : i32 to vector<1x32xi32>
    %15 = arith.addi %4, %14 : vector<1x32xi32>
    %16 = arith.select %13, %15, %4 : vector<1x32xi1>, vector<1x32xi32>
    %c1_i32_3 = arith.constant 1 : i32
    %17 = vector.broadcast %c1_i32_3 : i32 to vector<1x32xi32>
    %18 = arith.cmpi sge, %16, %17 : vector<1x32xi32>
    %c16_i32_4 = arith.constant 16 : i32
    %19 = vector.broadcast %c16_i32_4 : i32 to vector<1x32xi32>
    %20 = arith.cmpi sle, %16, %19 : vector<1x32xi32>
    %21 = arith.andi %18, %20 : vector<1x32xi1>
    %c-1_i32 = arith.constant -1 : i32
    %22 = vector.broadcast %c-1_i32 : i32 to vector<1x32xi32>
    %23 = arith.cmpi sge, %16, %22 : vector<1x32xi32>
    %c14_i32 = arith.constant 14 : i32
    %24 = vector.broadcast %c14_i32 : i32 to vector<1x32xi32>
    %25 = arith.cmpi sle, %16, %24 : vector<1x32xi32>
    %26 = arith.andi %23, %25 : vector<1x32xi1>
    %c2_i32 = arith.constant 2 : i32
    %27 = vector.broadcast %c2_i32 : i32 to vector<1x32xi32>
    %28 = arith.cmpi sge, %16, %27 : vector<1x32xi32>
    %c17_i32 = arith.constant 17 : i32
    %29 = vector.broadcast %c17_i32 : i32 to vector<1x32xi32>
    %30 = arith.cmpi sle, %16, %29 : vector<1x32xi32>
    %31 = arith.andi %28, %30 : vector<1x32xi1>
    %c-2_i32 = arith.constant -2 : i32
    %32 = vector.broadcast %c-2_i32 : i32 to vector<1x32xi32>
    %33 = arith.cmpi sge, %16, %32 : vector<1x32xi32>
    %c13_i32 = arith.constant 13 : i32
    %34 = vector.broadcast %c13_i32 : i32 to vector<1x32xi32>
    %35 = arith.cmpi sle, %16, %34 : vector<1x32xi32>
    %36 = arith.andi %33, %35 : vector<1x32xi1>
    %c3_i32 = arith.constant 3 : i32
    %37 = vector.broadcast %c3_i32 : i32 to vector<1x32xi32>
    %38 = arith.cmpi sge, %16, %37 : vector<1x32xi32>
    %c18_i32 = arith.constant 18 : i32
    %39 = vector.broadcast %c18_i32 : i32 to vector<1x32xi32>
    %40 = arith.cmpi sle, %16, %39 : vector<1x32xi32>
    %41 = arith.andi %38, %40 : vector<1x32xi1>
    %c-3_i32 = arith.constant -3 : i32
    %42 = vector.broadcast %c-3_i32 : i32 to vector<1x32xi32>
    %43 = arith.cmpi sge, %16, %42 : vector<1x32xi32>
    %c12_i32 = arith.constant 12 : i32
    %44 = vector.broadcast %c12_i32 : i32 to vector<1x32xi32>
    %45 = arith.cmpi sle, %16, %44 : vector<1x32xi32>
    %46 = arith.andi %43, %45 : vector<1x32xi1>
    %c0 = arith.constant 0 : index
    %c0_5 = arith.constant 0 : index
    %47 = vector.load %arg0[%c0, %c0_5] : memref<4x32xbf16, #tpu.memory_space<vmem>>, vector<4x32xbf16>
    %48 = vector.extract_strided_slice %47 {offsets = [0, 31], sizes = [4, 1], strides = [1, 1]} : vector<4x32xbf16> to vector<4x1xbf16>
    %49 = vector.extract_strided_slice %47 {offsets = [0, 0], sizes = [4, 31], strides = [1, 1]} : vector<4x32xbf16> to vector<4x31xbf16>
    %50 = tpu.concatenate %48, %49 in 1 : vector<4x1xbf16>, vector<4x31xbf16> -> vector<4x32xbf16>
    %cst = arith.constant 0.000000e+00 : bf16
    %51 = vector.shape_cast %21 : vector<1x32xi1> to vector<1x32xi1>
    %52 = vector.broadcast %51 : vector<1x32xi1> to vector<4x32xi1>
    %53 = vector.broadcast %cst : bf16 to vector<4x32xbf16>
    %54 = arith.select %52, %50, %53 : vector<4x32xi1>, vector<4x32xbf16>
    %55 = vector.extract_strided_slice %47 {offsets = [0, 1], sizes = [4, 31], strides = [1, 1]} : vector<4x32xbf16> to vector<4x31xbf16>
    %56 = vector.extract_strided_slice %47 {offsets = [0, 0], sizes = [4, 1], strides = [1, 1]} : vector<4x32xbf16> to vector<4x1xbf16>
    %57 = tpu.concatenate %55, %56 in 1 : vector<4x31xbf16>, vector<4x1xbf16> -> vector<4x32xbf16>
    %cst_6 = arith.constant 0.000000e+00 : bf16
    %58 = vector.shape_cast %26 : vector<1x32xi1> to vector<1x32xi1>
    %59 = vector.broadcast %58 : vector<1x32xi1> to vector<4x32xi1>
    %60 = vector.broadcast %cst_6 : bf16 to vector<4x32xbf16>
    %61 = arith.select %59, %57, %60 : vector<4x32xi1>, vector<4x32xbf16>
    %62 = tpu.concatenate %54, %47, %61 in 0 : vector<4x32xbf16>, vector<4x32xbf16>, vector<4x32xbf16> -> vector<12x32xbf16>
    %c0_7 = arith.constant 0 : index
    %c0_8 = arith.constant 0 : index
    %63 = vector.load %arg1[%c0_7, %c0_8] : memref<16x12xbf16, #tpu.memory_space<vmem>>, vector<16x12xbf16>
    %cst_9 = arith.constant dense<0.000000e+00> : vector<16x32xf32>
    %64 = tpu.matmul %63, %62, %cst_9 {dimension_numbers = #tpu.dot_dimension_numbers<[1], [0], [0], [1], [0, 0, 1, 1], [], []>} : vector<16x12xbf16>, vector<12x32xbf16>, vector<16x32xf32> -> vector<16x32xf32>
    %65 = vector.extract_strided_slice %64 {offsets = [0, 0], sizes = [8, 32], strides = [1, 1]} : vector<16x32xf32> to vector<8x32xf32>
    %66 = vector.extract_strided_slice %64 {offsets = [8, 0], sizes = [8, 32], strides = [1, 1]} : vector<16x32xf32> to vector<8x32xf32>
    %c0_10 = arith.constant 0 : index
    %c0_11 = arith.constant 0 : index
    %67 = vector.load %arg2[%c0_10, %c0_11] : memref<8x1xf32, #tpu.memory_space<vmem>>, vector<8x1xf32>
    %c0_12 = arith.constant 0 : index
    %c0_13 = arith.constant 0 : index
    %68 = vector.load %arg3[%c0_12, %c0_13] : memref<8x1xf32, #tpu.memory_space<vmem>>, vector<8x1xf32>
    %cst_14 = arith.constant dense<0.000000e+00> : vector<8xf32>
    %69 = vector.multi_reduction <add>, %65, %cst_14 [1] : vector<8x32xf32> to vector<8xf32>
    %70 = vector.shape_cast %69 : vector<8xf32> to vector<8x1xf32>
    %cst_15 = arith.constant 3.125000e-02 : f32
    %71 = vector.broadcast %cst_15 : f32 to vector<8x1xf32>
    %72 = arith.mulf %70, %71 : vector<8x1xf32>
    %73 = arith.mulf %65, %65 : vector<8x32xf32>
    %cst_16 = arith.constant dense<0.000000e+00> : vector<8xf32>
    %74 = vector.multi_reduction <add>, %73, %cst_16 [1] : vector<8x32xf32> to vector<8xf32>
    %75 = vector.shape_cast %74 : vector<8xf32> to vector<8x1xf32>
    %cst_17 = arith.constant 3.125000e-02 : f32
    %76 = vector.broadcast %cst_17 : f32 to vector<8x1xf32>
    %77 = arith.mulf %75, %76 : vector<8x1xf32>
    %78 = arith.mulf %72, %72 : vector<8x1xf32>
    %79 = arith.subf %77, %78 : vector<8x1xf32>
    %cst_18 = arith.constant 9.99999974E-6 : f32
    %80 = vector.broadcast %cst_18 : f32 to vector<8x1xf32>
    %81 = arith.addf %79, %80 : vector<8x1xf32>
    %82 = math.rsqrt %81 : vector<8x1xf32>
    %83 = arith.mulf %67, %82 : vector<8x1xf32>
    %84 = vector.broadcast %83 : vector<8x1xf32> to vector<8x32xf32>
    %85 = arith.mulf %65, %84 : vector<8x32xf32>
    %86 = arith.mulf %72, %83 : vector<8x1xf32>
    %87 = arith.subf %68, %86 : vector<8x1xf32>
    %88 = vector.broadcast %87 : vector<8x1xf32> to vector<8x32xf32>
    %89 = arith.addf %85, %88 : vector<8x32xf32>
    %cst_19 = arith.constant 0.000000e+00 : f32
    %90 = vector.broadcast %cst_19 : f32 to vector<8x32xf32>
    %91 = arith.maximumf %89, %90 : vector<8x32xf32>
    %92 = arith.truncf %91 : vector<8x32xf32> to vector<8x32xbf16>
    %93 = vector.extract_strided_slice %92 {offsets = [0, 31], sizes = [8, 1], strides = [1, 1]} : vector<8x32xbf16> to vector<8x1xbf16>
    %94 = vector.extract_strided_slice %92 {offsets = [0, 0], sizes = [8, 31], strides = [1, 1]} : vector<8x32xbf16> to vector<8x31xbf16>
    %95 = tpu.concatenate %93, %94 in 1 : vector<8x1xbf16>, vector<8x31xbf16> -> vector<8x32xbf16>
    %cst_20 = arith.constant 0.000000e+00 : bf16
    %96 = vector.shape_cast %21 : vector<1x32xi1> to vector<1x32xi1>
    %97 = vector.broadcast %96 : vector<1x32xi1> to vector<8x32xi1>
    %98 = vector.broadcast %cst_20 : bf16 to vector<8x32xbf16>
    %99 = arith.select %97, %95, %98 : vector<8x32xi1>, vector<8x32xbf16>
    %100 = vector.extract_strided_slice %92 {offsets = [0, 1], sizes = [8, 31], strides = [1, 1]} : vector<8x32xbf16> to vector<8x31xbf16>
    %101 = vector.extract_strided_slice %92 {offsets = [0, 0], sizes = [8, 1], strides = [1, 1]} : vector<8x32xbf16> to vector<8x1xbf16>
    %102 = tpu.concatenate %100, %101 in 1 : vector<8x31xbf16>, vector<8x1xbf16> -> vector<8x32xbf16>
    %cst_21 = arith.constant 0.000000e+00 : bf16
    %103 = vector.shape_cast %26 : vector<1x32xi1> to vector<1x32xi1>
    %104 = vector.broadcast %103 : vector<1x32xi1> to vector<8x32xi1>
    %105 = vector.broadcast %cst_21 : bf16 to vector<8x32xbf16>
    %106 = arith.select %104, %102, %105 : vector<8x32xi1>, vector<8x32xbf16>
    %107 = tpu.concatenate %99, %92, %106 in 0 : vector<8x32xbf16>, vector<8x32xbf16>, vector<8x32xbf16> -> vector<24x32xbf16>
    %c0_22 = arith.constant 0 : index
    %c0_23 = arith.constant 0 : index
    %108 = vector.load %arg4[%c0_22, %c0_23] : memref<8x24xbf16, #tpu.memory_space<vmem>>, vector<8x24xbf16>
    %cst_24 = arith.constant dense<0.000000e+00> : vector<8x32xf32>
    %109 = tpu.matmul %108, %107, %cst_24 {dimension_numbers = #tpu.dot_dimension_numbers<[1], [0], [0], [1], [0, 0, 1, 1], [], []>} : vector<8x24xbf16>, vector<24x32xbf16>, vector<8x32xf32> -> vector<8x32xf32>
    %c0_25 = arith.constant 0 : index
    %c0_26 = arith.constant 0 : index
    %110 = vector.load %arg5[%c0_25, %c0_26] : memref<8x1xf32, #tpu.memory_space<vmem>>, vector<8x1xf32>
    %c0_27 = arith.constant 0 : index
    %c0_28 = arith.constant 0 : index
    %111 = vector.load %arg6[%c0_27, %c0_28] : memref<8x1xf32, #tpu.memory_space<vmem>>, vector<8x1xf32>
    %cst_29 = arith.constant dense<0.000000e+00> : vector<8xf32>
    %112 = vector.multi_reduction <add>, %109, %cst_29 [1] : vector<8x32xf32> to vector<8xf32>
    %113 = vector.shape_cast %112 : vector<8xf32> to vector<8x1xf32>
    %cst_30 = arith.constant 3.125000e-02 : f32
    %114 = vector.broadcast %cst_30 : f32 to vector<8x1xf32>
    %115 = arith.mulf %113, %114 : vector<8x1xf32>
    %116 = arith.mulf %109, %109 : vector<8x32xf32>
    %cst_31 = arith.constant dense<0.000000e+00> : vector<8xf32>
    %117 = vector.multi_reduction <add>, %116, %cst_31 [1] : vector<8x32xf32> to vector<8xf32>
    %118 = vector.shape_cast %117 : vector<8xf32> to vector<8x1xf32>
    %cst_32 = arith.constant 3.125000e-02 : f32
    %119 = vector.broadcast %cst_32 : f32 to vector<8x1xf32>
    %120 = arith.mulf %118, %119 : vector<8x1xf32>
    %121 = arith.mulf %115, %115 : vector<8x1xf32>
    %122 = arith.subf %120, %121 : vector<8x1xf32>
    %cst_33 = arith.constant 9.99999974E-6 : f32
    %123 = vector.broadcast %cst_33 : f32 to vector<8x1xf32>
    %124 = arith.addf %122, %123 : vector<8x1xf32>
    %125 = math.rsqrt %124 : vector<8x1xf32>
    %126 = arith.mulf %110, %125 : vector<8x1xf32>
    %127 = vector.broadcast %126 : vector<8x1xf32> to vector<8x32xf32>
    %128 = arith.mulf %109, %127 : vector<8x32xf32>
    %129 = arith.mulf %115, %126 : vector<8x1xf32>
    %130 = arith.subf %111, %129 : vector<8x1xf32>
    %131 = vector.broadcast %130 : vector<8x1xf32> to vector<8x32xf32>
    %132 = arith.addf %128, %131 : vector<8x32xf32>
    %133 = math.absf %132 : vector<8x32xf32>
    %c0_34 = arith.constant 0 : index
    %c0_35 = arith.constant 0 : index
    %134 = vector.load %arg16[%c0_34, %c0_35] : memref<32x2xf32, #tpu.memory_space<vmem>>, vector<32x2xf32>
    %cst_36 = arith.constant dense<0.000000e+00> : vector<8x2xf32>
    %135 = tpu.matmul %133, %134, %cst_36 {dimension_numbers = #tpu.dot_dimension_numbers<[1], [0], [0], [1], [0, 0, 1, 1], [], []>} : vector<8x32xf32>, vector<32x2xf32>, vector<8x2xf32> -> vector<8x2xf32>
    %c0_37 = arith.constant 0 : index
    %c0_38 = arith.constant 0 : index
    %136 = vector.load %arg7[%c0_37, %c0_38] : memref<8x8xf32, #tpu.memory_space<vmem>>, vector<8x8xf32>
    %cst_39 = arith.constant dense<0.000000e+00> : vector<8x2xf32>
    %137 = tpu.matmul %136, %135, %cst_39 {dimension_numbers = #tpu.dot_dimension_numbers<[1], [0], [0], [1], [0, 0, 1, 1], [], []>} : vector<8x8xf32>, vector<8x2xf32>, vector<8x2xf32> -> vector<8x2xf32>
    %c0_40 = arith.constant 0 : index
    %c0_41 = arith.constant 0 : index
    %138 = vector.load %arg8[%c0_40, %c0_41] : memref<8x1xf32, #tpu.memory_space<vmem>>, vector<8x1xf32>
    %139 = vector.broadcast %138 : vector<8x1xf32> to vector<8x2xf32>
    %140 = arith.addf %137, %139 : vector<8x2xf32>
    %c0_42 = arith.constant 0 : index
    %c0_43 = arith.constant 0 : index
    %141 = vector.load %arg9[%c0_42, %c0_43] : memref<8x1xf32, #tpu.memory_space<vmem>>, vector<8x1xf32>
    %c0_44 = arith.constant 0 : index
    %c0_45 = arith.constant 0 : index
    %142 = vector.load %arg10[%c0_44, %c0_45] : memref<8x1xf32, #tpu.memory_space<vmem>>, vector<8x1xf32>
    %cst_46 = arith.constant dense<0.000000e+00> : vector<8xf32>
    %143 = vector.multi_reduction <add>, %140, %cst_46 [1] : vector<8x2xf32> to vector<8xf32>
    %144 = vector.shape_cast %143 : vector<8xf32> to vector<8x1xf32>
    %cst_47 = arith.constant 5.000000e-01 : f32
    %145 = vector.broadcast %cst_47 : f32 to vector<8x1xf32>
    %146 = arith.mulf %144, %145 : vector<8x1xf32>
    %147 = arith.mulf %140, %140 : vector<8x2xf32>
    %cst_48 = arith.constant dense<0.000000e+00> : vector<8xf32>
    %148 = vector.multi_reduction <add>, %147, %cst_48 [1] : vector<8x2xf32> to vector<8xf32>
    %149 = vector.shape_cast %148 : vector<8xf32> to vector<8x1xf32>
    %cst_49 = arith.constant 5.000000e-01 : f32
    %150 = vector.broadcast %cst_49 : f32 to vector<8x1xf32>
    %151 = arith.mulf %149, %150 : vector<8x1xf32>
    %152 = arith.mulf %146, %146 : vector<8x1xf32>
    %153 = arith.subf %151, %152 : vector<8x1xf32>
    %cst_50 = arith.constant 9.99999974E-6 : f32
    %154 = vector.broadcast %cst_50 : f32 to vector<8x1xf32>
    %155 = arith.addf %153, %154 : vector<8x1xf32>
    %156 = math.rsqrt %155 : vector<8x1xf32>
    %157 = arith.mulf %141, %156 : vector<8x1xf32>
    %158 = vector.broadcast %157 : vector<8x1xf32> to vector<8x2xf32>
    %159 = arith.mulf %140, %158 : vector<8x2xf32>
    %160 = arith.mulf %146, %157 : vector<8x1xf32>
    %161 = arith.subf %142, %160 : vector<8x1xf32>
    %162 = vector.broadcast %161 : vector<8x1xf32> to vector<8x2xf32>
    %163 = arith.addf %159, %162 : vector<8x2xf32>
    %cst_51 = arith.constant 0.000000e+00 : f32
    %164 = vector.broadcast %cst_51 : f32 to vector<8x2xf32>
    %165 = arith.maximumf %163, %164 : vector<8x2xf32>
    %c0_52 = arith.constant 0 : index
    %c0_53 = arith.constant 0 : index
    %166 = vector.load %arg11[%c0_52, %c0_53] : memref<8x8xf32, #tpu.memory_space<vmem>>, vector<8x8xf32>
    %cst_54 = arith.constant dense<0.000000e+00> : vector<8x2xf32>
    %167 = tpu.matmul %166, %165, %cst_54 {dimension_numbers = #tpu.dot_dimension_numbers<[1], [0], [0], [1], [0, 0, 1, 1], [], []>} : vector<8x8xf32>, vector<8x2xf32>, vector<8x2xf32> -> vector<8x2xf32>
    %c0_55 = arith.constant 0 : index
    %c0_56 = arith.constant 0 : index
    %168 = vector.load %arg12[%c0_55, %c0_56] : memref<8x1xf32, #tpu.memory_space<vmem>>, vector<8x1xf32>
    %169 = vector.broadcast %168 : vector<8x1xf32> to vector<8x2xf32>
    %170 = arith.addf %167, %169 : vector<8x2xf32>
    %cst_57 = arith.constant 0.000000e+00 : f32
    %171 = vector.broadcast %cst_57 : f32 to vector<8x2xf32>
    %172 = arith.subf %171, %170 : vector<8x2xf32>
    %173 = math.exp %172 : vector<8x2xf32>
    %cst_58 = arith.constant 1.000000e+00 : f32
    %174 = vector.broadcast %cst_58 : f32 to vector<8x2xf32>
    %175 = arith.addf %174, %173 : vector<8x2xf32>
    %176 = tpu.reciprocal %175 {approx = true} : vector<8x2xf32> -> vector<8x2xf32>
    %177 = arith.mulf %135, %176 : vector<8x2xf32>
    %c0_59 = arith.constant 0 : index
    %c0_60 = arith.constant 0 : index
    %178 = vector.load %arg17[%c0_59, %c0_60] : memref<2x32xf32, #tpu.memory_space<vmem>>, vector<2x32xf32>
    %cst_61 = arith.constant dense<0.000000e+00> : vector<8x32xf32>
    %179 = tpu.matmul %177, %178, %cst_61 {dimension_numbers = #tpu.dot_dimension_numbers<[1], [0], [0], [1], [0, 0, 1, 1], [], []>} : vector<8x2xf32>, vector<2x32xf32>, vector<8x32xf32> -> vector<8x32xf32>
    %cst_62 = arith.constant 0.000000e+00 : f32
    %180 = vector.broadcast %cst_62 : f32 to vector<8x32xf32>
    %181 = arith.subf %180, %179 : vector<8x32xf32>
    %182 = arith.maximumf %181, %132 : vector<8x32xf32>
    %183 = arith.minimumf %179, %182 : vector<8x32xf32>
    %184 = arith.subf %132, %183 : vector<8x32xf32>
    %cst_63 = arith.constant dense<0.000000e+00> : vector<32xf32>
    %185 = vector.multi_reduction <add>, %184, %cst_63 [0] : vector<8x32xf32> to vector<32xf32>
    %186 = vector.shape_cast %185 : vector<32xf32> to vector<1x32xf32>
    %cst_64 = arith.constant 1.250000e-01 : f32
    %187 = vector.broadcast %cst_64 : f32 to vector<1x32xf32>
    %188 = arith.mulf %186, %187 : vector<1x32xf32>
    %cst_65 = arith.constant dense<0xFF800000> : vector<32xf32>
    %189 = vector.multi_reduction <maximumf>, %184, %cst_65 [0] : vector<8x32xf32> to vector<32xf32>
    %190 = vector.shape_cast %189 : vector<32xf32> to vector<1x32xf32>
    %191 = tpu.concatenate %188, %190 in 0 : vector<1x32xf32>, vector<1x32xf32> -> vector<2x32xf32>
    %192 = vector.extract_strided_slice %191 {offsets = [0, 29], sizes = [2, 3], strides = [1, 1]} : vector<2x32xf32> to vector<2x3xf32>
    %193 = vector.extract_strided_slice %191 {offsets = [0, 0], sizes = [2, 29], strides = [1, 1]} : vector<2x32xf32> to vector<2x29xf32>
    %194 = tpu.concatenate %192, %193 in 1 : vector<2x3xf32>, vector<2x29xf32> -> vector<2x32xf32>
    %cst_66 = arith.constant 0.000000e+00 : f32
    %195 = vector.shape_cast %41 : vector<1x32xi1> to vector<1x32xi1>
    %196 = vector.broadcast %195 : vector<1x32xi1> to vector<2x32xi1>
    %197 = vector.broadcast %cst_66 : f32 to vector<2x32xf32>
    %198 = arith.select %196, %194, %197 : vector<2x32xi1>, vector<2x32xf32>
    %199 = vector.extract_strided_slice %191 {offsets = [0, 30], sizes = [2, 2], strides = [1, 1]} : vector<2x32xf32> to vector<2x2xf32>
    %200 = vector.extract_strided_slice %191 {offsets = [0, 0], sizes = [2, 30], strides = [1, 1]} : vector<2x32xf32> to vector<2x30xf32>
    %201 = tpu.concatenate %199, %200 in 1 : vector<2x2xf32>, vector<2x30xf32> -> vector<2x32xf32>
    %cst_67 = arith.constant 0.000000e+00 : f32
    %202 = vector.shape_cast %31 : vector<1x32xi1> to vector<1x32xi1>
    %203 = vector.broadcast %202 : vector<1x32xi1> to vector<2x32xi1>
    %204 = vector.broadcast %cst_67 : f32 to vector<2x32xf32>
    %205 = arith.select %203, %201, %204 : vector<2x32xi1>, vector<2x32xf32>
    %206 = vector.extract_strided_slice %191 {offsets = [0, 31], sizes = [2, 1], strides = [1, 1]} : vector<2x32xf32> to vector<2x1xf32>
    %207 = vector.extract_strided_slice %191 {offsets = [0, 0], sizes = [2, 31], strides = [1, 1]} : vector<2x32xf32> to vector<2x31xf32>
    %208 = tpu.concatenate %206, %207 in 1 : vector<2x1xf32>, vector<2x31xf32> -> vector<2x32xf32>
    %cst_68 = arith.constant 0.000000e+00 : f32
    %209 = vector.shape_cast %21 : vector<1x32xi1> to vector<1x32xi1>
    %210 = vector.broadcast %209 : vector<1x32xi1> to vector<2x32xi1>
    %211 = vector.broadcast %cst_68 : f32 to vector<2x32xf32>
    %212 = arith.select %210, %208, %211 : vector<2x32xi1>, vector<2x32xf32>
    %213 = vector.extract_strided_slice %191 {offsets = [0, 1], sizes = [2, 31], strides = [1, 1]} : vector<2x32xf32> to vector<2x31xf32>
    %214 = vector.extract_strided_slice %191 {offsets = [0, 0], sizes = [2, 1], strides = [1, 1]} : vector<2x32xf32> to vector<2x1xf32>
    %215 = tpu.concatenate %213, %214 in 1 : vector<2x31xf32>, vector<2x1xf32> -> vector<2x32xf32>
    %cst_69 = arith.constant 0.000000e+00 : f32
    %216 = vector.shape_cast %26 : vector<1x32xi1> to vector<1x32xi1>
    %217 = vector.broadcast %216 : vector<1x32xi1> to vector<2x32xi1>
    %218 = vector.broadcast %cst_69 : f32 to vector<2x32xf32>
    %219 = arith.select %217, %215, %218 : vector<2x32xi1>, vector<2x32xf32>
    %220 = vector.extract_strided_slice %191 {offsets = [0, 2], sizes = [2, 30], strides = [1, 1]} : vector<2x32xf32> to vector<2x30xf32>
    %221 = vector.extract_strided_slice %191 {offsets = [0, 0], sizes = [2, 2], strides = [1, 1]} : vector<2x32xf32> to vector<2x2xf32>
    %222 = tpu.concatenate %220, %221 in 1 : vector<2x30xf32>, vector<2x2xf32> -> vector<2x32xf32>
    %cst_70 = arith.constant 0.000000e+00 : f32
    %223 = vector.shape_cast %36 : vector<1x32xi1> to vector<1x32xi1>
    %224 = vector.broadcast %223 : vector<1x32xi1> to vector<2x32xi1>
    %225 = vector.broadcast %cst_70 : f32 to vector<2x32xf32>
    %226 = arith.select %224, %222, %225 : vector<2x32xi1>, vector<2x32xf32>
    %227 = vector.extract_strided_slice %191 {offsets = [0, 3], sizes = [2, 29], strides = [1, 1]} : vector<2x32xf32> to vector<2x29xf32>
    %228 = vector.extract_strided_slice %191 {offsets = [0, 0], sizes = [2, 3], strides = [1, 1]} : vector<2x32xf32> to vector<2x3xf32>
    %229 = tpu.concatenate %227, %228 in 1 : vector<2x29xf32>, vector<2x3xf32> -> vector<2x32xf32>
    %cst_71 = arith.constant 0.000000e+00 : f32
    %230 = vector.shape_cast %46 : vector<1x32xi1> to vector<1x32xi1>
    %231 = vector.broadcast %230 : vector<1x32xi1> to vector<2x32xi1>
    %232 = vector.broadcast %cst_71 : f32 to vector<2x32xf32>
    %233 = arith.select %231, %229, %232 : vector<2x32xi1>, vector<2x32xf32>
    %234 = tpu.concatenate %198, %205, %212, %191, %219, %226, %233 in 0 : vector<2x32xf32>, vector<2x32xf32>, vector<2x32xf32>, vector<2x32xf32>, vector<2x32xf32>, vector<2x32xf32>, vector<2x32xf32> -> vector<14x32xf32>
    %c0_72 = arith.constant 0 : index
    %c0_73 = arith.constant 0 : index
    %235 = vector.load %arg13[%c0_72, %c0_73] : memref<1x14xf32, #tpu.memory_space<vmem>>, vector<1x14xf32>
    %cst_74 = arith.constant dense<0.000000e+00> : vector<1x32xf32>
    %236 = tpu.matmul %235, %234, %cst_74 {dimension_numbers = #tpu.dot_dimension_numbers<[1], [0], [0], [1], [0, 0, 1, 1], [], []>} : vector<1x14xf32>, vector<14x32xf32>, vector<1x32xf32> -> vector<1x32xf32>
    %cst_75 = arith.constant 0.000000e+00 : f32
    %237 = vector.broadcast %cst_75 : f32 to vector<1x32xf32>
    %238 = arith.subf %237, %236 : vector<1x32xf32>
    %239 = math.exp %238 : vector<1x32xf32>
    %cst_76 = arith.constant 1.000000e+00 : f32
    %240 = vector.broadcast %cst_76 : f32 to vector<1x32xf32>
    %241 = arith.addf %240, %239 : vector<1x32xf32>
    %242 = tpu.reciprocal %241 {approx = true} : vector<1x32xf32> -> vector<1x32xf32>
    %243 = vector.broadcast %242 : vector<1x32xf32> to vector<8x32xf32>
    %244 = arith.mulf %184, %243 : vector<8x32xf32>
    %c0_77 = arith.constant 0 : index
    %c0_78 = arith.constant 0 : index
    %245 = vector.load %arg14[%c0_77, %c0_78] : memref<8x1xf32, #tpu.memory_space<vmem>>, vector<8x1xf32>
    %c0_79 = arith.constant 0 : index
    %c0_80 = arith.constant 0 : index
    %246 = vector.load %arg15[%c0_79, %c0_80] : memref<8x1xf32, #tpu.memory_space<vmem>>, vector<8x1xf32>
    %cst_81 = arith.constant dense<0.000000e+00> : vector<8xf32>
    %247 = vector.multi_reduction <add>, %66, %cst_81 [1] : vector<8x32xf32> to vector<8xf32>
    %248 = vector.shape_cast %247 : vector<8xf32> to vector<8x1xf32>
    %cst_82 = arith.constant 3.125000e-02 : f32
    %249 = vector.broadcast %cst_82 : f32 to vector<8x1xf32>
    %250 = arith.mulf %248, %249 : vector<8x1xf32>
    %251 = arith.mulf %66, %66 : vector<8x32xf32>
    %cst_83 = arith.constant dense<0.000000e+00> : vector<8xf32>
    %252 = vector.multi_reduction <add>, %251, %cst_83 [1] : vector<8x32xf32> to vector<8xf32>
    %253 = vector.shape_cast %252 : vector<8xf32> to vector<8x1xf32>
    %cst_84 = arith.constant 3.125000e-02 : f32
    %254 = vector.broadcast %cst_84 : f32 to vector<8x1xf32>
    %255 = arith.mulf %253, %254 : vector<8x1xf32>
    %256 = arith.mulf %250, %250 : vector<8x1xf32>
    %257 = arith.subf %255, %256 : vector<8x1xf32>
    %cst_85 = arith.constant 9.99999974E-6 : f32
    %258 = vector.broadcast %cst_85 : f32 to vector<8x1xf32>
    %259 = arith.addf %257, %258 : vector<8x1xf32>
    %260 = math.rsqrt %259 : vector<8x1xf32>
    %261 = arith.mulf %245, %260 : vector<8x1xf32>
    %262 = vector.broadcast %261 : vector<8x1xf32> to vector<8x32xf32>
    %263 = arith.mulf %66, %262 : vector<8x32xf32>
    %264 = arith.mulf %250, %261 : vector<8x1xf32>
    %265 = arith.subf %246, %264 : vector<8x1xf32>
    %266 = vector.broadcast %265 : vector<8x1xf32> to vector<8x32xf32>
    %267 = arith.addf %263, %266 : vector<8x32xf32>
    %268 = arith.addf %244, %267 : vector<8x32xf32>
    %cst_86 = arith.constant 0.000000e+00 : f32
    %269 = vector.broadcast %cst_86 : f32 to vector<8x32xf32>
    %270 = arith.maximumf %268, %269 : vector<8x32xf32>
    %c0_87 = arith.constant 0 : index
    %c0_88 = arith.constant 0 : index
    %271 = vector.load %arg18[%c0_87, %c0_88] : memref<8x32xf32, #tpu.memory_space<vmem>>, vector<8x32xf32>
    tpu.vector_store %arg18[%c0_87, %c0_88], %270 {strides = array<i32>} : memref<8x32xf32, #tpu.memory_space<vmem>>, vector<8x32xf32>,
    return
  }
}

</mosaic_0001>

<llo_original>
// kernel: tpu_custom_call.1
$region0: #{tpu_custom_call.1}
  #allocation0 [shape = 'u32[]', space=smem, size = 0x4, offset = 0x4, fixed_abs, tag = 'smem constant byte address 0x4 - core index']
  #allocation1 [shape = 'u32[144,128]{1,0:T(1,128)}', space=vmem, size = 0x12000, scoped, tag = 'internal scratch']
  %s0 = inlined_call_operand.vmem [shape: bf16[4,32], index: 0, kind: input, shape index: {}]
  %s1 = inlined_call_operand.vmem [shape: bf16[16,12], index: 1, kind: input, shape index: {}]
  %s2 = inlined_call_operand.vmem [shape: f32[8,1], index: 2, kind: input, shape index: {}]
  %s3 = inlined_call_operand.vmem [shape: f32[8,1], index: 3, kind: input, shape index: {}]
  %s4 = inlined_call_operand.vmem [shape: bf16[8,24], index: 4, kind: input, shape index: {}]
  %s5 = inlined_call_operand.vmem [shape: f32[8,1], index: 5, kind: input, shape index: {}]
  %s6 = inlined_call_operand.vmem [shape: f32[8,1], index: 6, kind: input, shape index: {}]
  %s7 = inlined_call_operand.vmem [shape: f32[8,8], index: 7, kind: input, shape index: {}]
  %s8 = inlined_call_operand.vmem [shape: f32[8,1], index: 8, kind: input, shape index: {}]
  %s9 = inlined_call_operand.vmem [shape: f32[8,1], index: 9, kind: input, shape index: {}]
  %s10 = inlined_call_operand.vmem [shape: f32[8,1], index: 10, kind: input, shape index: {}]
  %s11 = inlined_call_operand.vmem [shape: f32[8,8], index: 11, kind: input, shape index: {}]
  %s12 = inlined_call_operand.vmem [shape: f32[8,1], index: 12, kind: input, shape index: {}]
  %s13 = inlined_call_operand.vmem [shape: f32[1,14], index: 13, kind: input, shape index: {}]
  %s14 = inlined_call_operand.vmem [shape: f32[8,1], index: 14, kind: input, shape index: {}]
  %s15 = inlined_call_operand.vmem [shape: f32[8,1], index: 15, kind: input, shape index: {}]
  %s16 = inlined_call_operand.vmem [shape: f32[32,2], index: 16, kind: input, shape index: {}]
  %s17 = inlined_call_operand.vmem [shape: f32[2,32], index: 17, kind: input, shape index: {}]
  %s18 = inlined_call_operand.hbm [shape: f32[8,32], index: 18, kind: output, shape index: {}]
  %s19 = sld [smem:[#allocation0]]
  $region82: #{tpu_custom_call.1} parent=0
    _
  %s21 = ssub.s32 1, %s19
  %s22 = scalar_select 0, %s21, %s19
  $region1: #{tpu_custom_call.1} parent=0
    #allocation2 [shape = 'u8[4096]{0}', space=vmem, size = 0x1000, scoped, tag = 'output window, operand 0, single buffered']
    #allocation3 [shape = 's32[1]{0}', space=sflag, size = 0x4, scoped, tag = 'scoped memory for tpu_custom_call.1']
    %23 = vsyncpa [#allocation3], 0
    // Predicated region
    $region2: #{tpu_custom_call.1} parent=1 // pred_check
      _
    $region3: #{tpu_custom_call.1} parent=1 // pred_check_branch
      %25 = sbr.rel (0) target = $region5
    $region4: #{tpu_custom_call.1} parent=1 // pred_region
      _
    $region5: #{tpu_custom_call.1} parent=1 // pred_fallthru
      _
    // Predicated region
    $region6: #{tpu_custom_call.1} parent=1 // pred_check
      _
    $region7: #{tpu_custom_call.1} parent=1 // pred_check_branch
      %27 = sbr.rel (0) target = $region9
    $region8: #{tpu_custom_call.1} parent=1 // pred_region
      _
    $region9: #{tpu_custom_call.1} parent=1 // pred_fallthru
      _
    // Predicated region
    $region10: #{tpu_custom_call.1} parent=1 // pred_check
      _
    $region11: #{tpu_custom_call.1} parent=1 // pred_check_branch
      %29 = sbr.rel (0) target = $region13
    $region12: #{tpu_custom_call.1} parent=1 // pred_region
      _
    $region13: #{tpu_custom_call.1} parent=1 // pred_fallthru
      _
    // Predicated region
    $region14: #{tpu_custom_call.1} parent=1 // pred_check
      _
    $region15: #{tpu_custom_call.1} parent=1 // pred_check_branch
      %31 = sbr.rel (0) target = $region17
    $region16: #{tpu_custom_call.1} parent=1 // pred_region
      _
    $region17: #{tpu_custom_call.1} parent=1 // pred_fallthru
      _
    // Predicated region
    $region18: #{tpu_custom_call.1} parent=1 // pred_check
      _
    $region19: #{tpu_custom_call.1} parent=1 // pred_check_branch
      %33 = sbr.rel (0) target = $region21
    $region20: #{tpu_custom_call.1} parent=1 // pred_region
      _
    $region21: #{tpu_custom_call.1} parent=1 // pred_fallthru
      _
    // Predicated region
    $region22: #{tpu_custom_call.1} parent=1 // pred_check
      _
    $region23: #{tpu_custom_call.1} parent=1 // pred_check_branch
      %35 = sbr.rel (0) target = $region25
    $region24: #{tpu_custom_call.1} parent=1 // pred_region
      _
    $region25: #{tpu_custom_call.1} parent=1 // pred_fallthru
      _
    // Predicated region
    $region26: #{tpu_custom_call.1} parent=1 // pred_check
      _
    $region27: #{tpu_custom_call.1} parent=1 // pred_check_branch
      %37 = sbr.rel (0) target = $region29
    $region28: #{tpu_custom_call.1} parent=1 // pred_region
      _
    $region29: #{tpu_custom_call.1} parent=1 // pred_fallthru
      _
    // Predicated region
    $region30: #{tpu_custom_call.1} parent=1 // pred_check
      _
    $region31: #{tpu_custom_call.1} parent=1 // pred_check_branch
      %39 = sbr.rel (0) target = $region33
    $region32: #{tpu_custom_call.1} parent=1 // pred_region
      _
    $region33: #{tpu_custom_call.1} parent=1 // pred_fallthru
      _
    // Predicated region
    $region34: #{tpu_custom_call.1} parent=1 // pred_check
      _
    $region35: #{tpu_custom_call.1} parent=1 // pred_check_branch
      %41 = sbr.rel (0) target = $region37
    $region36: #{tpu_custom_call.1} parent=1 // pred_region
      _
    $region37: #{tpu_custom_call.1} parent=1 // pred_fallthru
      _
    // Predicated region
    $region38: #{tpu_custom_call.1} parent=1 // pred_check
      _
    $region39: #{tpu_custom_call.1} parent=1 // pred_check_branch
      %43 = sbr.rel (0) target = $region41
    $region40: #{tpu_custom_call.1} parent=1 // pred_region
      _
    $region41: #{tpu_custom_call.1} parent=1 // pred_fallthru
      _
    // Predicated region
    $region42: #{tpu_custom_call.1} parent=1 // pred_check
      _
    $region43: #{tpu_custom_call.1} parent=1 // pred_check_branch
      %45 = sbr.rel (0) target = $region45
    $region44: #{tpu_custom_call.1} parent=1 // pred_region
      _
    $region45: #{tpu_custom_call.1} parent=1 // pred_fallthru
      _
    // Predicated region
    $region46: #{tpu_custom_call.1} parent=1 // pred_check
      _
    $region47: #{tpu_custom_call.1} parent=1 // pred_check_branch
      %47 = sbr.rel (0) target = $region49
    $region48: #{tpu_custom_call.1} parent=1 // pred_region
      _
    $region49: #{tpu_custom_call.1} parent=1 // pred_fallthru
      _
    // Predicated region
    $region50: #{tpu_custom_call.1} parent=1 // pred_check
      _
    $region51: #{tpu_custom_call.1} parent=1 // pred_check_branch
      %49 = sbr.rel (0) target = $region53
    $region52: #{tpu_custom_call.1} parent=1 // pred_region
      _
    $region53: #{tpu_custom_call.1} parent=1 // pred_fallthru
      _
    // Predicated region
    $region54: #{tpu_custom_call.1} parent=1 // pred_check
      _
    $region55: #{tpu_custom_call.1} parent=1 // pred_check_branch
      %51 = sbr.rel (0) target = $region57
    $region56: #{tpu_custom_call.1} parent=1 // pred_region
      _
    $region57: #{tpu_custom_call.1} parent=1 // pred_fallthru
      _
    // Predicated region
    $region58: #{tpu_custom_call.1} parent=1 // pred_check
      _
    $region59: #{tpu_custom_call.1} parent=1 // pred_check_branch
      %53 = sbr.rel (0) target = $region61
    $region60: #{tpu_custom_call.1} parent=1 // pred_region
      _
    $region61: #{tpu_custom_call.1} parent=1 // pred_fallthru
      _
    // Predicated region
    $region62: #{tpu_custom_call.1} parent=1 // pred_check
      _
    $region63: #{tpu_custom_call.1} parent=1 // pred_check_branch
      %55 = sbr.rel (0) target = $region65
    $region64: #{tpu_custom_call.1} parent=1 // pred_region
      _
    $region65: #{tpu_custom_call.1} parent=1 // pred_fallthru
      _
    // Predicated region
    $region66: #{tpu_custom_call.1} parent=1 // pred_check
      _
    $region67: #{tpu_custom_call.1} parent=1 // pred_check_branch
      %57 = sbr.rel (0) target = $region69
    $region68: #{tpu_custom_call.1} parent=1 // pred_region
      _
    $region69: #{tpu_custom_call.1} parent=1 // pred_fallthru
      _
    // Predicated region
    $region70: #{tpu_custom_call.1} parent=1 // pred_check
      _
    $region71: #{tpu_custom_call.1} parent=1 // pred_check_branch
      %59 = sbr.rel (0) target = $region73
    $region72: #{tpu_custom_call.1} parent=1 // pred_region
      _
    $region73: #{tpu_custom_call.1} parent=1 // pred_fallthru
      _
    %v61 = vlaneseq
    %v62 = vand.u32 %v61, 127
    %vm63 = vcmp.lt.s32.totalorder %v62, 0
    %v64 = vsub.s32 0, %v62
    %v65 = vsel %vm63, %v64, %v62
    %v66 = vshrl.u32 %v65, 4
    %v67 = vand.u32 %v65, 15
    %v68 = vsub.s32 0, %v67
    %v69 = vsel %vm63, %v68, %v67
    %vm70 = vcmp.ne.s32.totalorder %v69, 0
    %vm71 = vcmp.lt.s32.totalorder %v69, 0
    %vm72 = vmand %vm71, %vm70
    %v73 = vadd.s32 %v69, 16
    %v74 = vsel %vm72, %v73, %v69
    %vm75 = vcmp.ge.s32.totalorder %v74, 1
    %vm76 = vcmp.le.s32.totalorder %v74, 16
    %vm77 = vmand %vm75, %vm76
    %vm78 = vcmp.ge.s32.totalorder %v74, 4294967295
    %vm79 = vcmp.le.s32.totalorder %v74, 14
    %vm80 = vmand %vm78, %vm79
    %vm81 = vcmp.ge.s32.totalorder %v74, 2
    %vm82 = vcmp.le.s32.totalorder %v74, 17
    %vm83 = vmand %vm81, %vm82
    %vm84 = vcmp.ge.s32.totalorder %v74, 4294967294
    %vm85 = vcmp.le.s32.totalorder %v74, 13
    %vm86 = vmand %vm84, %vm85
    %vm87 = vcmp.ge.s32.totalorder %v74, 3
    %vm88 = vcmp.le.s32.totalorder %v74, 18
    %vm89 = vmand %vm87, %vm88
    %vm90 = vcmp.ge.s32.totalorder %v74, 4294967293
    %vm91 = vcmp.le.s32.totalorder %v74, 12
    %vm92 = vmand %vm90, %vm91
    %v93 = vld [vmem:[%s0] sm:$0x3]
    %v96 = vunpack.c.l.s4 1983009808
    %v97 = vunpack.c.0.s8 %v96
    %v98 = vlaneseq
    %v99 = vshrl.u32 %v98, 7
    %v100 = vsub.s32 %v97, %v99
    %v101 = vrot.slane %v93, %v100
    %102 = vrot.lane.b32.xlu0 %v101, 97
    %v103 = vpop.permute.xlu0 %102
    %104 = vrot.lane.b32.xlu0 %v101, 1
    %v105 = vpop.permute.xlu0 %104
    %vm106 = vcmask 7168
    %v109 = vsel %vm106, %v103, %v105
    %v111 = vsel %vm77, 1, 0
    %vm112 = vcmp.eq.s32.totalorder %v111, 1
    %vm113 = vmpackc.low %vm112, %vm112
    %v114 = vsel %vm113, %v109, 0
    %115 = vrot.lane.b32.xlu0 %v101, 127
    %v116 = vpop.permute.xlu0 %115
    %117 = vrot.lane.b32.xlu0 %v101, 31
    %v118 = vpop.permute.xlu0 %117
    %vm119 = vcmask 252928
    %v122 = vsel %vm119, %v116, %v118
    %v124 = vsel %vm80, 1, 0
    %vm125 = vcmp.eq.s32.totalorder %v124, 1
    %vm126 = vmpackc.low %vm125, %vm125
    %v127 = vsel %vm126, %v122, 0
    %v128 = vcombine.low %v93, %v93
    %v130 = vunpack.c.l.s4 1983009808
    %v131 = vunpack.c.0.s8 %v130
    %v132 = vlaneseq
    %v133 = vshrl.u32 %v132, 7
    %v134 = vsub.s32 %v131, %v133
    %v135 = vrot.slane %v128, %v134
    %v137 = vrot.slane %v127, 4
    %vm138 = vcmask 1041408
    %v141 = vsel %vm138, %v114, %v135
    %vm142 = vcmask 1043456
    %v144 = vsel %vm142, %v141, %v137
    %v145 = vld [vmem:[%s1] sm:$0xf]
    %v146 = vld [vmem:[%s1 + $0x4] sm:$0xf]
    %v149 = vunpack.c.l.b16 %v145
    %v150 = vunpack.c.l.b16 %v146
    %v151 = vpack.c.b16 %v150, %v149
    %vm152 = vcmask 97280
    %v154 = vsel %vm152, %v151, 0
    %vm156 = vcmask 1045504
    %v157 = vsel %vm156, %v144, 0
    %159 = vmatprep.subr.bf16.mxu0 0
    %160 = vmatpush1.bf16.msra.mxu0 %v157
    %161 = vmatprep.subr.bf16.mxu0 0
    %162 = vmatpush1.bf16.msra.mxu0 0
    %163 = vmatprep.subr.bf16.mxu0 0
    %164 = vmatpush1.bf16.msra.mxu0 0
    %165 = vmatprep.subr.bf16.mxu0 0
    %166 = vmatpush1.bf16.msra.mxu0 0
    %167 = vmatprep.subr.bf16.mxu0 0
    %168 = vmatpush1.bf16.msra.mxu0 0
    %169 = vmatprep.subr.bf16.mxu0 0
    %170 = vmatpush1.bf16.msra.mxu0 0
    %171 = vmatprep.subr.bf16.mxu0 0
    %172 = vmatpush1.bf16.msra.mxu0 0
    %173 = vmatprep.subr.bf16.mxu0 0
    %174 = vmatpush1.bf16.msra.mxu0 0
    %175 = vmatprep.subr.bf16.mxu0 0
    %176 = vmatpush1.bf16.msra.mxu0 0
    %177 = vmatprep.subr.bf16.mxu0 0
    %178 = vmatpush1.bf16.msra.mxu0 0
    %179 = vmatprep.subr.bf16.mxu0 0
    %180 = vmatpush1.bf16.msra.mxu0 0
    %181 = vmatprep.subr.bf16.mxu0 0
    %182 = vmatpush1.bf16.msra.mxu0 0
    %183 = vmatprep.subr.bf16.mxu0 0
    %184 = vmatpush1.bf16.msra.mxu0 0
    %185 = vmatprep.subr.bf16.mxu0 0
    %186 = vmatpush1.bf16.msra.mxu0 0
    %187 = vmatprep.subr.bf16.mxu0 0
    %188 = vmatpush1.bf16.msra.mxu0 0
    %189 = vmatprep.subr.bf16.mxu0 0
    %190 = vmatpush1.bf16.msra.mxu0 0
    %191 = vmatprep.mubr.bf16.mxu0 0
    %192 = vmatmul.mubr.bf16.gmra.mrb[0].mxu0 %v154
    %v193 = vpop.f32.mrb[0].mxu0
    %v194 = vadd.f32 0.0, %v193
    %v195 = vpop.f32.mrb[0].mxu0
    %v196 = vpop.f32.mrb[0].mxu0
    %v197 = vadd.f32 0.0, %v196
    %v198 = vpop.f32.mrb[0].mxu0
    %199 = vdwg.mxu0
    %v200 = vld [vmem:[%s2] sm:$0xff]
    %v201 = vld [vmem:[%s3] sm:$0xff]
    %vm202 = vcmask 261120
    %v203 = vsel %vm202, %v194, 0.0
    %204 = vadd.xlane.f32.xlu0 %v203
    %v205 = vpop.xlane.xlu0 %204
    %v206 = vmul.f32 %v205, 0.03125
    %v207 = vmul.f32 %v194, %v194
    %v208 = vsel %vm202, %v207, 0.0
    %209 = vadd.xlane.f32.xlu0 %v208
    %v210 = vpop.xlane.xlu0 %209
    %v211 = vmul.f32 %v210, 0.03125
    %v212 = vmul.f32 %v206, %v206
    %v213 = vsub.f32 %v211, %v212
    %v214 = vadd.f32 %v213, 1e-05
    %v215 = vrsqrt.pop %v214
    %v216 = vmul.f32 %v200, %v215
    %218 = vset.pattern.permute.xlu0 0
    %219 = vperm.xlu0 %218, %v216
    %v220 = vpop.permute.xlu0 %219
    %v222 = vmul.f32 %v194, %v220
    %v223 = vmul.f32 %v206, %v216
    %v224 = vsub.f32 %v201, %v223
    %226 = vset.pattern.permute.xlu0 0
    %227 = vperm.xlu0 %226, %v224
    %v228 = vpop.permute.xlu0 %227
    %v230 = vadd.f32 %v222, %v228
    %v231 = vmax.f32 %v230, 0.0
    %v232 = vpack.c.bf16 %v231, %v231
    %234 = vrot.lane.b32.xlu0 %v232, 97
    %v235 = vpop.permute.xlu0 %234
    %236 = vrot.lane.b32.xlu0 %v232, 1
    %v237 = vpop.permute.xlu0 %236
    %v240 = vsel %vm106, %v235, %v237
    %v242 = vsel %vm113, %v240, 0
    %243 = vrot.lane.b32.xlu0 %v232, 127
    %v244 = vpop.permute.xlu0 %243
    %245 = vrot.lane.b32.xlu0 %v232, 31
    %v246 = vpop.permute.xlu0 %245
    %v249 = vsel %vm119, %v244, %v246
    %v251 = vsel %vm126, %v249, 0
    %v252 = vrot.slane %v232, 4
    %v255 = vsel %vm142, %v242, %v252
    %v257 = vld [vmem:[%s4] sm:$0xf]
    %vm258 = vcmask 195584
    %v260 = vsel %vm258, %v257, 0
    %v263 = vsel %vm142, %v251, 0
    %265 = vmatprep.subr.bf16.mxu0 0
    %266 = vmatpush1.bf16.msra.mxu0 %v255
    %267 = vmatprep.subr.bf16.mxu0 0
    %268 = vmatpush1.bf16.msra.mxu0 %v263
    %269 = vmatprep.subr.bf16.mxu0 0
    %270 = vmatpush1.bf16.msra.mxu0 0
    %271 = vmatprep.subr.bf16.mxu0 0
    %272 = vmatpush1.bf16.msra.mxu0 0
    %273 = vmatprep.subr.bf16.mxu0 0
    %274 = vmatpush1.bf16.msra.mxu0 0
    %275 = vmatprep.subr.bf16.mxu0 0
    %276 = vmatpush1.bf16.msra.mxu0 0
    %277 = vmatprep.subr.bf16.mxu0 0
    %278 = vmatpush1.bf16.msra.mxu0 0
    %279 = vmatprep.subr.bf16.mxu0 0
    %280 = vmatpush1.bf16.msra.mxu0 0
    %281 = vmatprep.subr.bf16.mxu0 0
    %282 = vmatpush1.bf16.msra.mxu0 0
    %283 = vmatprep.subr.bf16.mxu0 0
    %284 = vmatpush1.bf16.msra.mxu0 0
    %285 = vmatprep.subr.bf16.mxu0 0
    %286 = vmatpush1.bf16.msra.mxu0 0
    %287 = vmatprep.subr.bf16.mxu0 0
    %288 = vmatpush1.bf16.msra.mxu0 0
    %289 = vmatprep.subr.bf16.mxu0 0
    %290 = vmatpush1.bf16.msra.mxu0 0
    %291 = vmatprep.subr.bf16.mxu0 0
    %292 = vmatpush1.bf16.msra.mxu0 0
    %293 = vmatprep.subr.bf16.mxu0 0
    %294 = vmatpush1.bf16.msra.mxu0 0
    %295 = vmatprep.subr.bf16.mxu0 0
    %296 = vmatpush1.bf16.msra.mxu0 0
    %297 = vmatprep.mubr.bf16.mxu0 0
    %298 = vmatmul.mubr.bf16.gmra.mrb[0].mxu0 %v260
    %v299 = vpop.f32.mrb[0].mxu0
    %v300 = vadd.f32 0.0, %v299
    %v301 = vpop.f32.mrb[0].mxu0
    %v302 = vpop.f32.mrb[0].mxu0
    %v303 = vpop.f32.mrb[0].mxu0
    %304 = vdwg.mxu0
    %v305 = vld [vmem:[%s5] sm:$0xff]
    %v306 = vld [vmem:[%s6] sm:$0xff]
    %v307 = vsel %vm202, %v300, 0.0
    %308 = vadd.xlane.f32.xlu0 %v307
    %v309 = vpop.xlane.xlu0 %308
    %v310 = vmul.f32 %v309, 0.03125
    %v311 = vmul.f32 %v300, %v300
    %v312 = vsel %vm202, %v311, 0.0
    %313 = vadd.xlane.f32.xlu0 %v312
    %v314 = vpop.xlane.xlu0 %313
    %v315 = vmul.f32 %v314, 0.03125
    %v316 = vmul.f32 %v310, %v310
    %v317 = vsub.f32 %v315, %v316
    %v318 = vadd.f32 %v317, 1e-05
    %v319 = vrsqrt.pop %v318
    %v320 = vmul.f32 %v305, %v319
    %322 = vset.pattern.permute.xlu0 0
    %323 = vperm.xlu0 %322, %v320
    %v324 = vpop.permute.xlu0 %323
    %v326 = vmul.f32 %v300, %v324
    %v327 = vmul.f32 %v310, %v320
    %v328 = vsub.f32 %v306, %v327
    %330 = vset.pattern.permute.xlu0 0
    %331 = vperm.xlu0 %330, %v328
    %v332 = vpop.permute.xlu0 %331
    %v334 = vadd.f32 %v326, %v332
    %v335 = vand.u32 2147483647, %v334
    %v336 = vld [vmem:[%s16] sm:$0xff]
    %v337 = vld [vmem:[%s16 + $0x8] sm:$0xff]
    %v338 = vld [vmem:[%s16 + $0x10] sm:$0xff]
    %v339 = vld [vmem:[%s16 + $0x18] sm:$0xff]
    %v341 = vsel %vm202, %v335, 0
    %343 = vmatprep.subr.mxu0 0.0
    %344 = vmatpush1.msra.mxu0 %v336
    %345 = vmatprep.subr.mxu0 0.0
    %346 = vmatpush1.msra.mxu0 %v337
    %347 = vmatprep.subr.mxu0 0.0
    %348 = vmatpush1.msra.mxu0 %v338
    %349 = vmatprep.subr.mxu0 0.0
    %350 = vmatpush1.msra.mxu0 %v339
    %351 = vmatprep.subr.mxu0 0.0
    %352 = vmatpush1.msra.mxu0 0.0
    %353 = vmatprep.subr.mxu0 0.0
    %354 = vmatpush1.msra.mxu0 0.0
    %355 = vmatprep.subr.mxu0 0.0
    %356 = vmatpush1.msra.mxu0 0.0
    %357 = vmatprep.subr.mxu0 0.0
    %358 = vmatpush1.msra.mxu0 0.0
    %359 = vmatprep.subr.mxu0 0.0
    %360 = vmatpush1.msra.mxu0 0.0
    %361 = vmatprep.subr.mxu0 0.0
    %362 = vmatpush1.msra.mxu0 0.0
    %363 = vmatprep.subr.mxu0 0.0
    %364 = vmatpush1.msra.mxu0 0.0
    %365 = vmatprep.subr.mxu0 0.0
    %366 = vmatpush1.msra.mxu0 0.0
    %367 = vmatprep.subr.mxu0 0.0
    %368 = vmatpush1.msra.mxu0 0.0
    %369 = vmatprep.subr.mxu0 0.0
    %370 = vmatpush1.msra.mxu0 0.0
    %371 = vmatprep.subr.mxu0 0.0
    %372 = vmatpush1.msra.mxu0 0.0
    %373 = vmatprep.subr.mxu0 0.0
    %374 = vmatpush1.msra.mxu0 0.0
    %375 = vmatprep.subr.mxu0 0.0
    %376 = vmatpush1.msra.mxu0 0.0
    %377 = vmatprep.subr.mxu0 0.0
    %378 = vmatpush1.msra.mxu0 0.0
    %379 = vmatprep.subr.mxu0 0.0
    %380 = vmatpush1.msra.mxu0 0.0
    %381 = vmatprep.subr.mxu0 0.0
    %382 = vmatpush1.msra.mxu0 0.0
    %383 = vmatprep.subr.mxu0 0.0
    %384 = vmatpush1.msra.mxu0 0.0
    %385 = vmatprep.subr.mxu0 0.0
    %386 = vmatpush1.msra.mxu0 0.0
    %387 = vmatprep.subr.mxu0 0.0
    %388 = vmatpush1.msra.mxu0 0.0
    %389 = vmatprep.subr.mxu0 0.0
    %390 = vmatpush1.msra.mxu0 0.0
    %391 = vmatprep.subr.mxu0 0.0
    %392 = vmatpush1.msra.mxu0 0.0
    %393 = vmatprep.subr.mxu0 0.0
    %394 = vmatpush1.msra.mxu0 0.0
    %395 = vmatprep.subr.mxu0 0.0
    %396 = vmatpush1.msra.mxu0 0.0
    %397 = vmatprep.subr.mxu0 0.0
    %398 = vmatpush1.msra.mxu0 0.0
    %399 = vmatprep.subr.mxu0 0.0
    %400 = vmatpush1.msra.mxu0 0.0
    %401 = vmatprep.subr.mxu0 0.0
    %402 = vmatpush1.msra.mxu0 0.0
    %403 = vmatprep.subr.mxu0 0.0
    %404 = vmatpush1.msra.mxu0 0.0
    %405 = vmatprep.subr.mxu0 0.0
    %406 = vmatpush1.msra.mxu0 0.0
    %407 = vmatprep.mubr.f32.mxu0 0.0
    %408 = vmatmul.mubr.f32.gmra.mrb[0].mxu0 %v341
    %v409 = vpop.f32.mrb[0].mxu0
    %v410 = vadd.f32 0.0, %v409
    %v411 = vpop.f32.mrb[0].mxu0
    %412 = vdwg.mxu0
    %v413 = vld [vmem:[%s7] sm:$0xff]
    %v414 = vld [vmem:[%s8] sm:$0xff]
    %416 = vset.pattern.permute.xlu0 0
    %417 = vperm.xlu0 %416, %v414
    %v418 = vpop.permute.xlu0 %417
    %vm420 = vcmask 64512
    %v422 = vsel %vm420, %v413, 0
    %424 = vmatprep.subr.mxu0 0.0
    %425 = vmatpush1.msra.mxu0 %v410
    %426 = vmatprep.subr.mxu0 0.0
    %427 = vmatpush1.msra.mxu0 0.0
    %428 = vmatprep.subr.mxu0 0.0
    %429 = vmatpush1.msra.mxu0 0.0
    %430 = vmatprep.subr.mxu0 0.0
    %431 = vmatpush1.msra.mxu0 0.0
    %432 = vmatprep.subr.mxu0 0.0
    %433 = vmatpush1.msra.mxu0 0.0
    %434 = vmatprep.subr.mxu0 0.0
    %435 = vmatpush1.msra.mxu0 0.0
    %436 = vmatprep.subr.mxu0 0.0
    %437 = vmatpush1.msra.mxu0 0.0
    %438 = vmatprep.subr.mxu0 0.0
    %439 = vmatpush1.msra.mxu0 0.0
    %440 = vmatprep.subr.mxu0 0.0
    %441 = vmatpush1.msra.mxu0 0.0
    %442 = vmatprep.subr.mxu0 0.0
    %443 = vmatpush1.msra.mxu0 0.0
    %444 = vmatprep.subr.mxu0 0.0
    %445 = vmatpush1.msra.mxu0 0.0
    %446 = vmatprep.subr.mxu0 0.0
    %447 = vmatpush1.msra.mxu0 0.0
    %448 = vmatprep.subr.mxu0 0.0
    %449 = vmatpush1.msra.mxu0 0.0
    %450 = vmatprep.subr.mxu0 0.0
    %451 = vmatpush1.msra.mxu0 0.0
    %452 = vmatprep.subr.mxu0 0.0
    %453 = vmatpush1.msra.mxu0 0.0
    %454 = vmatprep.subr.mxu0 0.0
    %455 = vmatpush1.msra.mxu0 0.0
    %456 = vmatprep.subr.mxu0 0.0
    %457 = vmatpush1.msra.mxu0 0.0
    %458 = vmatprep.subr.mxu0 0.0
    %459 = vmatpush1.msra.mxu0 0.0
    %460 = vmatprep.subr.mxu0 0.0
    %461 = vmatpush1.msra.mxu0 0.0
    %462 = vmatprep.subr.mxu0 0.0
    %463 = vmatpush1.msra.mxu0 0.0
    %464 = vmatprep.subr.mxu0 0.0
    %465 = vmatpush1.msra.mxu0 0.0
    %466 = vmatprep.subr.mxu0 0.0
    %467 = vmatpush1.msra.mxu0 0.0
    %468 = vmatprep.subr.mxu0 0.0
    %469 = vmatpush1.msra.mxu0 0.0
    %470 = vmatprep.subr.mxu0 0.0
    %471 = vmatpush1.msra.mxu0 0.0
    %472 = vmatprep.subr.mxu0 0.0
    %473 = vmatpush1.msra.mxu0 0.0
    %474 = vmatprep.subr.mxu0 0.0
    %475 = vmatpush1.msra.mxu0 0.0
    %476 = vmatprep.subr.mxu0 0.0
    %477 = vmatpush1.msra.mxu0 0.0
    %478 = vmatprep.subr.mxu0 0.0
    %479 = vmatpush1.msra.mxu0 0.0
    %480 = vmatprep.subr.mxu0 0.0
    %481 = vmatpush1.msra.mxu0 0.0
    %482 = vmatprep.subr.mxu0 0.0
    %483 = vmatpush1.msra.mxu0 0.0
    %484 = vmatprep.subr.mxu0 0.0
    %485 = vmatpush1.msra.mxu0 0.0
    %486 = vmatprep.subr.mxu0 0.0
    %487 = vmatpush1.msra.mxu0 0.0
    %488 = vmatprep.mubr.f32.mxu0 0.0
    %489 = vmatmul.mubr.f32.gmra.mrb[0].mxu0 %v422
    %v490 = vpop.f32.mrb[0].mxu0
    %v491 = vadd.f32 %v418, %v490
    %v492 = vpop.f32.mrb[0].mxu0
    %493 = vdwg.mxu0
    %v494 = vld [vmem:[%s9] sm:$0xff]
    %v495 = vld [vmem:[%s10] sm:$0xff]
    %vm496 = vcmask 15360
    %v497 = vsel %vm496, %v491, 0.0
    %498 = vadd.xlane.f32.xlu0 %v497
    %v499 = vpop.xlane.xlu0 %498
    %v500 = vmul.f32 %v499, 0.5
    %v501 = vmul.f32 %v491, %v491
    %v502 = vsel %vm496, %v501, 0.0
    %503 = vadd.xlane.f32.xlu0 %v502
    %v504 = vpop.xlane.xlu0 %503
    %v505 = vmul.f32 %v504, 0.5
    %v506 = vmul.f32 %v500, %v500
    %v507 = vsub.f32 %v505, %v506
    %v508 = vadd.f32 %v507, 1e-05
    %v509 = vrsqrt.pop %v508
    %v510 = vmul.f32 %v494, %v509
    %512 = vset.pattern.permute.xlu0 0
    %513 = vperm.xlu0 %512, %v510
    %v514 = vpop.permute.xlu0 %513
    %v516 = vmul.f32 %v491, %v514
    %v517 = vmul.f32 %v500, %v510
    %v518 = vsub.f32 %v495, %v517
    %520 = vset.pattern.permute.xlu0 0
    %521 = vperm.xlu0 %520, %v518
    %v522 = vpop.permute.xlu0 %521
    %v524 = vadd.f32 %v516, %v522
    %v525 = vmax.f32 %v524, 0.0
    %v526 = vld [vmem:[%s11] sm:$0xff]
    %v527 = vld [vmem:[%s12] sm:$0xff]
    %529 = vset.pattern.permute.xlu0 0
    %530 = vperm.xlu0 %529, %v527
    %v531 = vpop.permute.xlu0 %530
    %v534 = vsel %vm420, %v526, 0
    %536 = vmatprep.subr.mxu0 0.0
    %537 = vmatpush1.msra.mxu0 %v525
    %538 = vmatprep.subr.mxu0 0.0
    %539 = vmatpush1.msra.mxu0 0.0
    %540 = vmatprep.subr.mxu0 0.0
    %541 = vmatpush1.msra.mxu0 0.0
    %542 = vmatprep.subr.mxu0 0.0
    %543 = vmatpush1.msra.mxu0 0.0
    %544 = vmatprep.subr.mxu0 0.0
    %545 = vmatpush1.msra.mxu0 0.0
    %546 = vmatprep.subr.mxu0 0.0
    %547 = vmatpush1.msra.mxu0 0.0
    %548 = vmatprep.subr.mxu0 0.0
    %549 = vmatpush1.msra.mxu0 0.0
    %550 = vmatprep.subr.mxu0 0.0
    %551 = vmatpush1.msra.mxu0 0.0
    %552 = vmatprep.subr.mxu0 0.0
    %553 = vmatpush1.msra.mxu0 0.0
    %554 = vmatprep.subr.mxu0 0.0
    %555 = vmatpush1.msra.mxu0 0.0
    %556 = vmatprep.subr.mxu0 0.0
    %557 = vmatpush1.msra.mxu0 0.0
    %558 = vmatprep.subr.mxu0 0.0
    %559 = vmatpush1.msra.mxu0 0.0
    %560 = vmatprep.subr.mxu0 0.0
    %561 = vmatpush1.msra.mxu0 0.0
    %562 = vmatprep.subr.mxu0 0.0
    %563 = vmatpush1.msra.mxu0 0.0
    %564 = vmatprep.subr.mxu0 0.0
    %565 = vmatpush1.msra.mxu0 0.0
    %566 = vmatprep.subr.mxu0 0.0
    %567 = vmatpush1.msra.mxu0 0.0
    %568 = vmatprep.subr.mxu0 0.0
    %569 = vmatpush1.msra.mxu0 0.0
    %570 = vmatprep.subr.mxu0 0.0
    %571 = vmatpush1.msra.mxu0 0.0
    %572 = vmatprep.subr.mxu0 0.0
    %573 = vmatpush1.msra.mxu0 0.0
    %574 = vmatprep.subr.mxu0 0.0
    %575 = vmatpush1.msra.mxu0 0.0
    %576 = vmatprep.subr.mxu0 0.0
    %577 = vmatpush1.msra.mxu0 0.0
    %578 = vmatprep.subr.mxu0 0.0
    %579 = vmatpush1.msra.mxu0 0.0
    %580 = vmatprep.subr.mxu0 0.0
    %581 = vmatpush1.msra.mxu0 0.0
    %582 = vmatprep.subr.mxu0 0.0
    %583 = vmatpush1.msra.mxu0 0.0
    %584 = vmatprep.subr.mxu0 0.0
    %585 = vmatpush1.msra.mxu0 0.0
    %586 = vmatprep.subr.mxu0 0.0
    %587 = vmatpush1.msra.mxu0 0.0
    %588 = vmatprep.subr.mxu0 0.0
    %589 = vmatpush1.msra.mxu0 0.0
    %590 = vmatprep.subr.mxu0 0.0
    %591 = vmatpush1.msra.mxu0 0.0
    %592 = vmatprep.subr.mxu0 0.0
    %593 = vmatpush1.msra.mxu0 0.0
    %594 = vmatprep.subr.mxu0 0.0
    %595 = vmatpush1.msra.mxu0 0.0
    %596 = vmatprep.subr.mxu0 0.0
    %597 = vmatpush1.msra.mxu0 0.0
    %598 = vmatprep.subr.mxu0 0.0
    %599 = vmatpush1.msra.mxu0 0.0
    %600 = vmatprep.mubr.f32.mxu0 0.0
    %601 = vmatmul.mubr.f32.gmra.mrb[0].mxu0 %v534
    %v602 = vpop.f32.mrb[0].mxu0
    %v603 = vadd.f32 %v531, %v602
    %v604 = vpop.f32.mrb[0].mxu0
    %605 = vdwg.mxu0
    %v606 = vsub.f32 0.0, %v603
    %v607 = vmul.f32 %v606, 1.442695
    %v608 = vpow.pop %v607
    %v609 = vadd.f32 %v608, 1.0
    %v610 = vrcp.pop %v609
    %v611 = vmul.f32 %v410, %v610
    %v612 = vld [vmem:[%s17] sm:$0x3]
    %v614 = vsel %vm496, %v611, 0
    %v617 = vsel %vm138, %v612, 0
    %619 = vmatprep.subr.mxu0 0.0
    %620 = vmatpush1.msra.mxu0 %v617
    %621 = vmatprep.subr.mxu0 0.0
    %622 = vmatpush1.msra.mxu0 0.0
    %623 = vmatprep.subr.mxu0 0.0
    %624 = vmatpush1.msra.mxu0 0.0
    %625 = vmatprep.subr.mxu0 0.0
    %626 = vmatpush1.msra.mxu0 0.0
    %627 = vmatprep.subr.mxu0 0.0
    %628 = vmatpush1.msra.mxu0 0.0
    %629 = vmatprep.subr.mxu0 0.0
    %630 = vmatpush1.msra.mxu0 0.0
    %631 = vmatprep.subr.mxu0 0.0
    %632 = vmatpush1.msra.mxu0 0.0
    %633 = vmatprep.subr.mxu0 0.0
    %634 = vmatpush1.msra.mxu0 0.0
    %635 = vmatprep.subr.mxu0 0.0
    %636 = vmatpush1.msra.mxu0 0.0
    %637 = vmatprep.subr.mxu0 0.0
    %638 = vmatpush1.msra.mxu0 0.0
    %639 = vmatprep.subr.mxu0 0.0
    %640 = vmatpush1.msra.mxu0 0.0
    %641 = vmatprep.subr.mxu0 0.0
    %642 = vmatpush1.msra.mxu0 0.0
    %643 = vmatprep.subr.mxu0 0.0
    %644 = vmatpush1.msra.mxu0 0.0
    %645 = vmatprep.subr.mxu0 0.0
    %646 = vmatpush1.msra.mxu0 0.0
    %647 = vmatprep.subr.mxu0 0.0
    %648 = vmatpush1.msra.mxu0 0.0
    %649 = vmatprep.subr.mxu0 0.0
    %650 = vmatpush1.msra.mxu0 0.0
    %651 = vmatprep.subr.mxu0 0.0
    %652 = vmatpush1.msra.mxu0 0.0
    %653 = vmatprep.subr.mxu0 0.0
    %654 = vmatpush1.msra.mxu0 0.0
    %655 = vmatprep.subr.mxu0 0.0
    %656 = vmatpush1.msra.mxu0 0.0
    %657 = vmatprep.subr.mxu0 0.0
    %658 = vmatpush1.msra.mxu0 0.0
    %659 = vmatprep.subr.mxu0 0.0
    %660 = vmatpush1.msra.mxu0 0.0
    %661 = vmatprep.subr.mxu0 0.0
    %662 = vmatpush1.msra.mxu0 0.0
    %663 = vmatprep.subr.mxu0 0.0
    %664 = vmatpush1.msra.mxu0 0.0
    %665 = vmatprep.subr.mxu0 0.0
    %666 = vmatpush1.msra.mxu0 0.0
    %667 = vmatprep.subr.mxu0 0.0
    %668 = vmatpush1.msra.mxu0 0.0
    %669 = vmatprep.subr.mxu0 0.0
    %670 = vmatpush1.msra.mxu0 0.0
    %671 = vmatprep.subr.mxu0 0.0
    %672 = vmatpush1.msra.mxu0 0.0
    %673 = vmatprep.subr.mxu0 0.0
    %674 = vmatpush1.msra.mxu0 0.0
    %675 = vmatprep.subr.mxu0 0.0
    %676 = vmatpush1.msra.mxu0 0.0
    %677 = vmatprep.subr.mxu0 0.0
    %678 = vmatpush1.msra.mxu0 0.0
    %679 = vmatprep.subr.mxu0 0.0
    %680 = vmatpush1.msra.mxu0 0.0
    %681 = vmatprep.subr.mxu0 0.0
    %682 = vmatpush1.msra.mxu0 0.0
    %683 = vmatprep.mubr.f32.mxu0 0.0
    %684 = vmatmul.mubr.f32.gmra.mrb[0].mxu0 %v614
    %v685 = vpop.f32.mrb[0].mxu0
    %v686 = vadd.f32 0.0, %v685
    %v687 = vpop.f32.mrb[0].mxu0
    %688 = vdwg.mxu0
    %v689 = vsub.f32 0.0, %v686
    %v690 = vmax.f32 %v689, %v334
    %v691 = vmin.f32 %v686, %v690
    %v692 = vsub.f32 %v334, %v691
    %v693 = vsel %vm202, %v692, 0.0
    %v694 = vrot.slane %v693, 4
    %v695 = vadd.f32 %v693, %v694
    %v696 = vrot.slane %v695, 2
    %v697 = vadd.f32 %v695, %v696
    %v698 = vrot.slane %v697, 1
    %v699 = vadd.f32 %v697, %v698
    %v700 = vmul.f32 %v699, 0.125
    %v701 = vsel %vm202, %v692, -inf
    %v702 = vrot.slane %v701, 4
    %v703 = vmax.f32 %v701, %v702
    %v704 = vrot.slane %v703, 2
    %v705 = vmax.f32 %v703, %v704
    %v706 = vrot.slane %v705, 1
    %v707 = vmax.f32 %v705, %v706
    %vm708 = vcmask 1040384
    %v709 = vsel %vm708, %v700, %v707
    %711 = vrot.lane.b32.xlu0 %v709, 99
    %v712 = vpop.permute.xlu0 %711
    %714 = vrot.lane.b32.xlu0 %v709, 3
    %v715 = vpop.permute.xlu0 %714
    %vm717 = vcmask 23552
    %v718 = vsel %vm717, %v712, %v715
    %v719 = vsel %vm89, 1, 0
    %vm720 = vcmp.eq.s32.totalorder %v719, 1
    %v721 = vsel %vm720, %v718, 0.0
    %722 = vrot.lane.b32.xlu0 %v709, 98
    %v723 = vpop.permute.xlu0 %722
    %725 = vrot.lane.b32.xlu0 %v709, 2
    %v726 = vpop.permute.xlu0 %725
    %v728 = vsel %vm496, %v723, %v726
    %v729 = vsel %vm83, 1, 0
    %vm730 = vcmp.eq.s32.totalorder %v729, 1
    %v731 = vsel %vm730, %v728, 0.0
    %732 = vrot.lane.b32.xlu0 %v709, 97
    %v733 = vpop.permute.xlu0 %732
    %735 = vrot.lane.b32.xlu0 %v709, 1
    %v736 = vpop.permute.xlu0 %735
    %v738 = vsel %vm106, %v733, %v736
    %v739 = vsel %vm112, %v738, 0.0
    %740 = vrot.lane.b32.xlu0 %v709, 127
    %v741 = vpop.permute.xlu0 %740
    %743 = vrot.lane.b32.xlu0 %v709, 31
    %v744 = vpop.permute.xlu0 %743
    %v746 = vsel %vm119, %v741, %v744
    %v747 = vsel %vm125, %v746, 0.0
    %748 = vrot.lane.b32.xlu0 %v709, 126
    %v749 = vpop.permute.xlu0 %748
    %751 = vrot.lane.b32.xlu0 %v709, 30
    %v752 = vpop.permute.xlu0 %751
    %vm754 = vcmask 244736
    %v755 = vsel %vm754, %v749, %v752
    %v756 = vsel %vm86, 1, 0
    %vm757 = vcmp.eq.s32.totalorder %v756, 1
    %v758 = vsel %vm757, %v755, 0.0
    %759 = vrot.lane.b32.xlu0 %v709, 125
    %v760 = vpop.permute.xlu0 %759
    %762 = vrot.lane.b32.xlu0 %v709, 29
    %v763 = vpop.permute.xlu0 %762
    %vm765 = vcmask 236544
    %v766 = vsel %vm765, %v760, %v763
    %v767 = vsel %vm92, 1, 0
    %vm768 = vcmp.eq.s32.totalorder %v767, 1
    %v769 = vsel %vm768, %v766, 0.0
    %v771 = vrot.slane %v731, 6
    %v774 = vrot.slane %v739, 4
    %v776 = vrot.slane %v709, 2
    %v779 = vrot.slane %v758, 6
    %v782 = vrot.slane %v769, 4
    %v784 = vsel %vm138, %v721, %v771
    %v785 = vsel %vm142, %v784, %v774
    %v786 = vsel %vm156, %v785, %v776
    %v787 = vsel %vm138, %v747, %v779
    %v788 = vsel %vm142, %v787, %v782
    %v789 = vld [vmem:[%s13] sm:$0x1]
    %vm790 = vcmask 113664
    %v792 = vsel %vm790, %v789, 0
    %v795 = vsel %vm156, %v788, 0
    %797 = vmatprep.subr.mxu0 0.0
    %798 = vmatpush1.msra.mxu0 %v786
    %799 = vmatprep.subr.mxu0 0.0
    %800 = vmatpush1.msra.mxu0 %v795
    %801 = vmatprep.subr.mxu0 0.0
    %802 = vmatpush1.msra.mxu0 0.0
    %803 = vmatprep.subr.mxu0 0.0
    %804 = vmatpush1.msra.mxu0 0.0
    %805 = vmatprep.subr.mxu0 0.0
    %806 = vmatpush1.msra.mxu0 0.0
    %807 = vmatprep.subr.mxu0 0.0
    %808 = vmatpush1.msra.mxu0 0.0
    %809 = vmatprep.subr.mxu0 0.0
    %810 = vmatpush1.msra.mxu0 0.0
    %811 = vmatprep.subr.mxu0 0.0
    %812 = vmatpush1.msra.mxu0 0.0
    %813 = vmatprep.subr.mxu0 0.0
    %814 = vmatpush1.msra.mxu0 0.0
    %815 = vmatprep.subr.mxu0 0.0
    %816 = vmatpush1.msra.mxu0 0.0
    %817 = vmatprep.subr.mxu0 0.0
    %818 = vmatpush1.msra.mxu0 0.0
    %819 = vmatprep.subr.mxu0 0.0
    %820 = vmatpush1.msra.mxu0 0.0
    %821 = vmatprep.subr.mxu0 0.0
    %822 = vmatpush1.msra.mxu0 0.0
    %823 = vmatprep.subr.mxu0 0.0
    %824 = vmatpush1.msra.mxu0 0.0
    %825 = vmatprep.subr.mxu0 0.0
    %826 = vmatpush1.msra.mxu0 0.0
    %827 = vmatprep.subr.mxu0 0.0
    %828 = vmatpush1.msra.mxu0 0.0
    %829 = vmatprep.subr.mxu0 0.0
    %830 = vmatpush1.msra.mxu0 0.0
    %831 = vmatprep.subr.mxu0 0.0
    %832 = vmatpush1.msra.mxu0 0.0
    %833 = vmatprep.subr.mxu0 0.0
    %834 = vmatpush1.msra.mxu0 0.0
    %835 = vmatprep.subr.mxu0 0.0
    %836 = vmatpush1.msra.mxu0 0.0
    %837 = vmatprep.subr.mxu0 0.0
    %838 = vmatpush1.msra.mxu0 0.0
    %839 = vmatprep.subr.mxu0 0.0
    %840 = vmatpush1.msra.mxu0 0.0
    %841 = vmatprep.subr.mxu0 0.0
    %842 = vmatpush1.msra.mxu0 0.0
    %843 = vmatprep.subr.mxu0 0.0
    %844 = vmatpush1.msra.mxu0 0.0
    %845 = vmatprep.subr.mxu0 0.0
    %846 = vmatpush1.msra.mxu0 0.0
    %847 = vmatprep.subr.mxu0 0.0
    %848 = vmatpush1.msra.mxu0 0.0
    %849 = vmatprep.subr.mxu0 0.0
    %850 = vmatpush1.msra.mxu0 0.0
    %851 = vmatprep.subr.mxu0 0.0
    %852 = vmatpush1.msra.mxu0 0.0
    %853 = vmatprep.subr.mxu0 0.0
    %854 = vmatpush1.msra.mxu0 0.0
    %855 = vmatprep.subr.mxu0 0.0
    %856 = vmatpush1.msra.mxu0 0.0
    %857 = vmatprep.subr.mxu0 0.0
    %858 = vmatpush1.msra.mxu0 0.0
    %859 = vmatprep.subr.mxu0 0.0
    %860 = vmatpush1.msra.mxu0 0.0
    %861 = vmatprep.mubr.f32.mxu0 0.0
    %862 = vmatmul.mubr.f32.gmra.mrb[0].mxu0 %v792
    %v863 = vpop.f32.mrb[0].mxu0
    %v864 = vadd.f32 0.0, %v863
    %v865 = vpop.f32.mrb[0].mxu0
    %866 = vdwg.mxu0
    %v867 = vsub.f32 0.0, %v864
    %v868 = vmul.f32 %v867, 1.442695
    %v869 = vpow.pop %v868
    %v870 = vadd.f32 %v869, 1.0
    %v871 = vrcp.pop %v870
    %v872 = vlaneseq
    %v873 = vshrl.u32 %v872, 7
    %v874 = vsub.s32 0, %v873
    %v875 = vrot.slane %v871, %v874
    %v876 = vmul.f32 %v692, %v875
    %v877 = vld [vmem:[%s14] sm:$0xff]
    %v878 = vld [vmem:[%s15] sm:$0xff]
    %v879 = vsel %vm202, %v197, 0.0
    %880 = vadd.xlane.f32.xlu0 %v879
    %v881 = vpop.xlane.xlu0 %880
    %v882 = vmul.f32 %v881, 0.03125
    %v883 = vmul.f32 %v197, %v197
    %v884 = vsel %vm202, %v883, 0.0
    %885 = vadd.xlane.f32.xlu0 %v884
    %v886 = vpop.xlane.xlu0 %885
    %v887 = vmul.f32 %v886, 0.03125
    %v888 = vmul.f32 %v882, %v882
    %v889 = vsub.f32 %v887, %v888
    %v890 = vadd.f32 %v889, 1e-05
    %v891 = vrsqrt.pop %v890
    %v892 = vmul.f32 %v877, %v891
    %894 = vset.pattern.permute.xlu0 0
    %895 = vperm.xlu0 %894, %v892
    %v896 = vpop.permute.xlu0 %895
    %v898 = vmul.f32 %v197, %v896
    %v899 = vmul.f32 %v882, %v892
    %v900 = vsub.f32 %v878, %v899
    %902 = vset.pattern.permute.xlu0 0
    %903 = vperm.xlu0 %902, %v900
    %v904 = vpop.permute.xlu0 %903
    %v906 = vadd.f32 %v898, %v904
    %v907 = vadd.f32 %v876, %v906
    %v908 = vmax.f32 %v907, 0.0
    %909 = vst.msk [vmem:[#allocation2] sm:$0xff] %vm202, %v908
    // Predicated region
    $region74: #{tpu_custom_call.1} parent=1 // pred_check
      _
    $region75: #{tpu_custom_call.1} parent=1 // pred_check_branch
      %911 = sbr.rel (0) target = $region77
    $region76: #{tpu_custom_call.1} parent=1 // pred_region
      %s913 = ssub.s32 128, 128
      %914 = vsyncadd [#allocation3], %s913
      %s916 = sshll.u32 [#allocation2], 4
      %s917 = int_to_ptr.vmem [resolvable:$true] %s916
      %919 = dma.vmem_to_hbm [thread:$0]  %s917, 128, %s18, [#allocation3]
    $region77: #{tpu_custom_call.1} parent=1 // pred_fallthru
      _
    // Predicated region
    $region78: #{tpu_custom_call.1} parent=1 // pred_check
      _
    $region79: #{tpu_custom_call.1} parent=1 // pred_check_branch
      %921 = sbr.rel (0) target = $region81
    $region80: #{tpu_custom_call.1} parent=1 // pred_region
      %922 = dma.done [#allocation3], 128
    $region81: #{tpu_custom_call.1} parent=1 // pred_fallthru
      _
    %923 = vsyncpa [#allocation3], 1

</llo_original>
